<compile_context>
chip_gen: v7x
topology: tpu7x:2x2x1
jax: 0.10.0
libtpu: 0.0.40
codegen_flags: <defaults>
</compile_context>

<pallas_src>
import numpy as np
import jax
import jax.numpy as jnp
from jax.experimental import pallas as pl
from jax.experimental.pallas import tpu as pltpu

# ---------------- module hyper-parameters (from the PyTorch __init__) ----------------
C_IN, C_OUT = 10, 1
K_H, K_W = 2, 1
STRIDE = (1, 2)
PADDING = (1, 2)
DILATION = (2, 3)
GROUPS = 1            # see TODO(synk) above

N, H_IN, W_IN = 1, 2, 3
H_OUT = (H_IN - 1) * STRIDE[0] - 2 * PADDING[0] + DILATION[0] * (K_H - 1) + 1   # = 2
W_OUT = (W_IN - 1) * STRIDE[1] - 2 * PADDING[1] + DILATION[1] * (K_W - 1) + 1   # = 1

K_DIM = C_IN * H_IN * W_IN          # 60  (flattened input features)
OUT_DIM = C_OUT * H_OUT * W_OUT     # 2   (flattened output features)


def build_convt_operands(weight: np.ndarray, bias: np.ndarray):
    """Static operands M (K_DIM, OUT_DIM) and B (1, OUT_DIM) such that
    flat_x @ M + B == ConvTranspose2d(x) flattened.  Built once with numpy."""
    M = np.zeros((K_DIM, OUT_DIM), dtype=np.float32)
    cin_per_g = C_IN // GROUPS
    cout_per_g = C_OUT // GROUPS
    for ci in range(C_IN):
        g = ci // cin_per_g
        for col in range(cout_per_g):
            co = g * cout_per_g + col
            for ih in range(H_IN):
                for iw in range(W_IN):
                    for kh in range(K_H):
                        for kw in range(K_W):
                            oh = ih * STRIDE[0] - PADDING[0] + kh * DILATION[0]
                            ow = iw * STRIDE[1] - PADDING[1] + kw * DILATION[1]
                            if 0 <= oh < H_OUT and 0 <= ow < W_OUT:
                                row = (ci * H_IN + ih) * W_IN + iw
                                colo = (co * H_OUT + oh) * W_OUT + ow
                                M[row, colo] += weight[ci, col, kh, kw]
    B = np.zeros((1, OUT_DIM), dtype=np.float32)
    for co in range(C_OUT):
        for oh in range(H_OUT):
            for ow in range(W_OUT):
                B[0, (co * H_OUT + oh) * W_OUT + ow] = bias[co]
    return M, B


# ------------------------------- Pallas kernel ---------------------------------------
def convt_gelu_kernel(x_ref, m_ref, b_ref, o_ref):
    # transposed conv as one small matmul, bias folded in as a broadcast add
    v1 = jnp.dot(x_ref[...], m_ref[...],
                 preferred_element_type=jnp.float32) + b_ref[...]
    # tanh-GELU elementwise chain, restructured to cut VALU multiplies:
    #   0.5 * v1 * (1 + tanh(0.79788456 * v1 * (1 + 0.044715 * v1^2)))
    u = v1 * v1
    inner = v1 * (1.0 + 0.044715 * u)
    o_ref[...] = 0.5 * v1 * (1.0 + jnp.tanh(0.7978845608028654 * inner))


def convt_gelu(x_nchw: jnp.ndarray, m: jnp.ndarray, b: jnp.ndarray) -> jnp.ndarray:
    """x_nchw: (N, C_IN, H_IN, W_IN) f32 -> (N, C_OUT, H_OUT, W_OUT) f32."""
    n = x_nchw.shape[0]
    x_flat = x_nchw.reshape(n, K_DIM)            # metadata-only reshape

    out = pl.pallas_call(
        convt_gelu_kernel,
        out_shape=jax.ShapeDtypeStruct((n, OUT_DIM), jnp.float32),
        in_specs=[
            pl.BlockSpec(memory_space=pltpu.MemorySpace.VMEM),   # x   (n, 60)
            pl.BlockSpec(memory_space=pltpu.MemorySpace.VMEM),   # M   (60, 2)
            pl.BlockSpec(memory_space=pltpu.MemorySpace.VMEM),   # B   (1, 2)
        ],
        out_specs=pl.BlockSpec(memory_space=pltpu.MemorySpace.VMEM),
    )(x_flat, m, b)

    return out.reshape(n, C_OUT, H_OUT, W_OUT)   # metadata-only reshape


if __name__ == "__main__":
    key = jax.random.PRNGKey(0)
    kx, kw, kb = jax.random.split(key, 3)

    # deterministic parameter init (PyTorch-style uniform bound)
    fan = (C_IN // GROUPS) * K_H * K_W
    bound = 1.0 / np.sqrt(fan)
    weight = np.asarray(
        jax.random.uniform(kw, (C_IN, C_OUT // GROUPS, K_H, K_W),
                           minval=-bound, maxval=bound, dtype=jnp.float32))
    bias = np.asarray(
        jax.random.uniform(kb, (C_OUT,), minval=-bound, maxval=bound,
                           dtype=jnp.float32))

    # static operands built once at init time (numpy), not in the per-call path
    M_np, B_np = build_convt_operands(weight, bias)
    M = jnp.asarray(M_np)
    B = jnp.asarray(B_np)

    # input consistent with the module: x1 = torch.randn(1, 10, 2, 3)
    x1 = jax.random.normal(kx, (N, C_IN, H_IN, W_IN), dtype=jnp.float32)

    fwd = jax.jit(convt_gelu)
    y = fwd(x1, M, B)
    jax.block_until_ready(y)
    assert y.shape == (N, C_OUT, H_OUT, W_OUT)
    assert bool(jnp.all(jnp.isfinite(y)))
    print("KERNEL_OK")
</pallas_src>

<mosaic_0001>
module attributes {stable_mosaic.version = 11 : i64} {
  func.func @convt_gelu_kernel(%arg0: memref<1x60xf32, #tpu.memory_space<vmem>>, %arg1: memref<60x2xf32, #tpu.memory_space<vmem>>, %arg2: memref<1x2xf32, #tpu.memory_space<vmem>>, %arg3: memref<1x2xf32, #tpu.memory_space<vmem>>) attributes {dimension_semantics = [], scalar_prefetch = 0 : i64, scratch_operands = 0 : i64, tpu.core_type = #tpu.core_type<tc>} {
    %c0 = arith.constant 0 : index
    %c0_0 = arith.constant 0 : index
    %0 = vector.load %arg0[%c0, %c0_0] : memref<1x60xf32, #tpu.memory_space<vmem>>, vector<1x60xf32>
    %c0_1 = arith.constant 0 : index
    %c0_2 = arith.constant 0 : index
    %1 = vector.load %arg1[%c0_1, %c0_2] : memref<60x2xf32, #tpu.memory_space<vmem>>, vector<60x2xf32>
    %cst = arith.constant dense<0.000000e+00> : vector<1x2xf32>
    %2 = tpu.matmul %0, %1, %cst {dimension_numbers = #tpu.dot_dimension_numbers<[1], [0], [0], [1], [0, 0, 1, 1], [], []>} : vector<1x60xf32>, vector<60x2xf32>, vector<1x2xf32> -> vector<1x2xf32>
    %c0_3 = arith.constant 0 : index
    %c0_4 = arith.constant 0 : index
    %3 = vector.load %arg2[%c0_3, %c0_4] : memref<1x2xf32, #tpu.memory_space<vmem>>, vector<1x2xf32>
    %4 = arith.addf %2, %3 : vector<1x2xf32>
    %5 = arith.mulf %4, %4 : vector<1x2xf32>
    %cst_5 = arith.constant 4.471500e-02 : f32
    %6 = vector.broadcast %cst_5 : f32 to vector<1x2xf32>
    %7 = arith.mulf %6, %5 : vector<1x2xf32>
    %cst_6 = arith.constant 1.000000e+00 : f32
    %8 = vector.broadcast %cst_6 : f32 to vector<1x2xf32>
    %9 = arith.addf %8, %7 : vector<1x2xf32>
    %10 = arith.mulf %4, %9 : vector<1x2xf32>
    %cst_7 = arith.constant 5.000000e-01 : f32
    %11 = vector.broadcast %cst_7 : f32 to vector<1x2xf32>
    %12 = arith.mulf %11, %4 : vector<1x2xf32>
    %cst_8 = arith.constant 0.797884583 : f32
    %13 = vector.broadcast %cst_8 : f32 to vector<1x2xf32>
    %14 = arith.mulf %13, %10 : vector<1x2xf32>
    %15 = math.tanh %14 : vector<1x2xf32>
    %cst_9 = arith.constant 1.000000e+00 : f32
    %16 = vector.broadcast %cst_9 : f32 to vector<1x2xf32>
    %17 = arith.addf %16, %15 : vector<1x2xf32>
    %18 = arith.mulf %12, %17 : vector<1x2xf32>
    %c0_10 = arith.constant 0 : index
    %c0_11 = arith.constant 0 : index
    %19 = vector.load %arg3[%c0_10, %c0_11] : memref<1x2xf32, #tpu.memory_space<vmem>>, vector<1x2xf32>
    tpu.vector_store %arg3[%c0_10, %c0_11], %18 {strides = array<i32>} : memref<1x2xf32, #tpu.memory_space<vmem>>, vector<1x2xf32>,
    return
  }
}

</mosaic_0001>

<llo_original>
// kernel: convt_gelu.1
$region0: #{convt_gelu.1}
  #allocation0 [shape = 'u32[]', space=smem, size = 0x4, offset = 0x4, fixed_abs, tag = 'smem constant byte address 0x4 - core index']
  #allocation1 [shape = 'u32[144,128]{1,0:T(1,128)}', space=vmem, size = 0x12000, scoped, tag = 'internal scratch']
  %s0 = inlined_call_operand.vmem [shape: f32[1,60], index: 0, kind: input, shape index: {}]
  %s1 = inlined_call_operand.vmem [shape: f32[60,2], index: 1, kind: input, shape index: {}]
  %s2 = inlined_call_operand.vmem [shape: f32[1,2], index: 2, kind: input, shape index: {}]
  %s3 = inlined_call_operand.hbm [shape: f32[1,2], index: 3, kind: output, shape index: {}]
  %s4 = sld [smem:[#allocation0]]
  $region22: #{convt_gelu.1} parent=0
    _
  %s6 = ssub.s32 1, %s4
  %s7 = scalar_select 0, %s6, %s4
  $region1: #{convt_gelu.1} parent=0
    #allocation2 [shape = 'u8[512]{0}', space=vmem, size = 0x400, scoped, tag = 'output window, operand 0, single buffered']
    #allocation3 [shape = 's32[1]{0}', space=sflag, size = 0x4, scoped, tag = 'scoped memory for convt_gelu.1']
    %8 = vsyncpa [#allocation3], 0
    // Predicated region
    $region2: #{convt_gelu.1} parent=1 // pred_check
      _
    $region3: #{convt_gelu.1} parent=1 // pred_check_branch
      %10 = sbr.rel (0) target = $region5
    $region4: #{convt_gelu.1} parent=1 // pred_region
      _
    $region5: #{convt_gelu.1} parent=1 // pred_fallthru
      _
    // Predicated region
    $region6: #{convt_gelu.1} parent=1 // pred_check
      _
    $region7: #{convt_gelu.1} parent=1 // pred_check_branch
      %12 = sbr.rel (0) target = $region9
    $region8: #{convt_gelu.1} parent=1 // pred_region
      _
    $region9: #{convt_gelu.1} parent=1 // pred_fallthru
      _
    // Predicated region
    $region10: #{convt_gelu.1} parent=1 // pred_check
      _
    $region11: #{convt_gelu.1} parent=1 // pred_check_branch
      %14 = sbr.rel (0) target = $region13
    $region12: #{convt_gelu.1} parent=1 // pred_region
      _
    $region13: #{convt_gelu.1} parent=1 // pred_fallthru
      _
    %v15 = vld [vmem:[%s0] sm:$0x1]
    %v16 = vld [vmem:[%s1] sm:$0xff]
    %v17 = vld [vmem:[%s1 + $0x8] sm:$0xff]
    %v18 = vld [vmem:[%s1 + $0x10] sm:$0xff]
    %v19 = vld [vmem:[%s1 + $0x18] sm:$0xff]
    %v20 = vld [vmem:[%s1 + $0x20] sm:$0xff]
    %v21 = vld [vmem:[%s1 + $0x28] sm:$0xff]
    %v22 = vld [vmem:[%s1 + $0x30] sm:$0xff]
    %v23 = vld [vmem:[%s1 + $0x38] sm:$0xf]
    %v24 = vld [vmem:[%s2] sm:$0x1]
    %vm25 = vcmask 490496
    %v27 = vsel %vm25, %v15, 0
    %vm29 = vcmask 1043456
    %v31 = vsel %vm29, %v23, 0
    %33 = vmatprep.subr.mxu0 0.0
    %34 = vmatpush1.msra.mxu0 %v16
    %35 = vmatprep.subr.mxu0 0.0
    %36 = vmatpush1.msra.mxu0 %v17
    %37 = vmatprep.subr.mxu0 0.0
    %38 = vmatpush1.msra.mxu0 %v18
    %39 = vmatprep.subr.mxu0 0.0
    %40 = vmatpush1.msra.mxu0 %v19
    %41 = vmatprep.subr.mxu0 0.0
    %42 = vmatpush1.msra.mxu0 %v20
    %43 = vmatprep.subr.mxu0 0.0
    %44 = vmatpush1.msra.mxu0 %v21
    %45 = vmatprep.subr.mxu0 0.0
    %46 = vmatpush1.msra.mxu0 %v22
    %47 = vmatprep.subr.mxu0 0.0
    %48 = vmatpush1.msra.mxu0 %v31
    %49 = vmatprep.subr.mxu0 0.0
    %50 = vmatpush1.msra.mxu0 0.0
    %51 = vmatprep.subr.mxu0 0.0
    %52 = vmatpush1.msra.mxu0 0.0
    %53 = vmatprep.subr.mxu0 0.0
    %54 = vmatpush1.msra.mxu0 0.0
    %55 = vmatprep.subr.mxu0 0.0
    %56 = vmatpush1.msra.mxu0 0.0
    %57 = vmatprep.subr.mxu0 0.0
    %58 = vmatpush1.msra.mxu0 0.0
    %59 = vmatprep.subr.mxu0 0.0
    %60 = vmatpush1.msra.mxu0 0.0
    %61 = vmatprep.subr.mxu0 0.0
    %62 = vmatpush1.msra.mxu0 0.0
    %63 = vmatprep.subr.mxu0 0.0
    %64 = vmatpush1.msra.mxu0 0.0
    %65 = vmatprep.subr.mxu0 0.0
    %66 = vmatpush1.msra.mxu0 0.0
    %67 = vmatprep.subr.mxu0 0.0
    %68 = vmatpush1.msra.mxu0 0.0
    %69 = vmatprep.subr.mxu0 0.0
    %70 = vmatpush1.msra.mxu0 0.0
    %71 = vmatprep.subr.mxu0 0.0
    %72 = vmatpush1.msra.mxu0 0.0
    %73 = vmatprep.subr.mxu0 0.0
    %74 = vmatpush1.msra.mxu0 0.0
    %75 = vmatprep.subr.mxu0 0.0
    %76 = vmatpush1.msra.mxu0 0.0
    %77 = vmatprep.subr.mxu0 0.0
    %78 = vmatpush1.msra.mxu0 0.0
    %79 = vmatprep.subr.mxu0 0.0
    %80 = vmatpush1.msra.mxu0 0.0
    %81 = vmatprep.subr.mxu0 0.0
    %82 = vmatpush1.msra.mxu0 0.0
    %83 = vmatprep.subr.mxu0 0.0
    %84 = vmatpush1.msra.mxu0 0.0
    %85 = vmatprep.subr.mxu0 0.0
    %86 = vmatpush1.msra.mxu0 0.0
    %87 = vmatprep.subr.mxu0 0.0
    %88 = vmatpush1.msra.mxu0 0.0
    %89 = vmatprep.subr.mxu0 0.0
    %90 = vmatpush1.msra.mxu0 0.0
    %91 = vmatprep.subr.mxu0 0.0
    %92 = vmatpush1.msra.mxu0 0.0
    %93 = vmatprep.subr.mxu0 0.0
    %94 = vmatpush1.msra.mxu0 0.0
    %95 = vmatprep.subr.mxu0 0.0
    %96 = vmatpush1.msra.mxu0 0.0
    %97 = vmatprep.mubr.f32.mxu0 0.0
    %98 = vmatmul.mubr.f32.gmra.mrb[0].mxu0 %v27
    %v99 = vpop.f32.mrb[0].mxu0
    %v100 = vadd.f32 %v24, %v99
    %v101 = vpop.f32.mrb[0].mxu0
    %102 = vdwg.mxu0
    %v103 = vmul.f32 %v100, %v100
    %v104 = vmul.f32 %v103, 0.044715
    %v105 = vadd.f32 %v104, 1.0
    %v106 = vmul.f32 %v100, %v105
    %v107 = vmul.f32 %v100, 0.5
    %v108 = vmul.f32 %v106, 0.7978846
    %v109 = vtanh.pop %v108
    %v110 = vadd.f32 %v109, 1.0
    %v111 = vmul.f32 %v107, %v110
    %vm112 = vcmask 8192
    %113 = vst.msk [vmem:[#allocation2] sm:$0x1] %vm112, %v111
    // Predicated region
    $region14: #{convt_gelu.1} parent=1 // pred_check
      _
    $region15: #{convt_gelu.1} parent=1 // pred_check_branch
      %115 = sbr.rel (0) target = $region17
    $region16: #{convt_gelu.1} parent=1 // pred_region
      %s117 = ssub.s32 16, 16
      %118 = vsyncadd [#allocation3], %s117
      %s120 = sshll.u32 [#allocation2], 4
      %s121 = int_to_ptr.vmem [resolvable:$true] %s120
      %123 = dma.vmem_to_hbm [thread:$0]  %s121, 16, %s3, [#allocation3]
    $region17: #{convt_gelu.1} parent=1 // pred_fallthru
      _
    // Predicated region
    $region18: #{convt_gelu.1} parent=1 // pred_check
      _
    $region19: #{convt_gelu.1} parent=1 // pred_check_branch
      %125 = sbr.rel (0) target = $region21
    $region20: #{convt_gelu.1} parent=1 // pred_region
      %126 = dma.done [#allocation3], 16
    $region21: #{convt_gelu.1} parent=1 // pred_fallthru
      _
    %127 = vsyncpa [#allocation3], 1

</llo_original>
